<compile_context>
chip_gen: v7x
topology: tpu7x:2x2x1
jax: 0.10.0
libtpu: 0.0.40
codegen_flags: <defaults>
</compile_context>

<pallas_src>
import functools

import jax
import jax.numpy as jnp
from jax import lax
from jax.experimental import pallas as pl
from jax.experimental.pallas import tpu as pltpu


def _pcb_neck_kernel(x_ref, seg_ref, wc_ref, wf_ref, bf_ref, out_ref, *, inv_s):
    xp = x_ref[...]                    # (bt, C, P*S)  native dtype, lane-dense
    seg = seg_ref[...]                 # (P*S, P)      0/1 part-membership mask

    # Per-part global average pool as ONE MXU matmul with f32 accumulation,
    # scaled by 1/S afterwards.  No f32 copy of the big tile, no lane-sparse
    # reduction; the MXU is otherwise idle.
    g = lax.dot_general(xp, seg, (((2,), (0,)), ((), ())),
                        preferred_element_type=jnp.float32)       # (bt, C, P)
    g = g * jnp.float32(inv_s)

    # Relayout only the tiny pooled tensor to part-major for batched matmuls.
    g = jnp.transpose(g, (2, 0, 1))                               # (P, bt, C)

    wc = wc_ref[...].astype(jnp.float32)                          # (P, mid, C)
    wf = wf_ref[...].astype(jnp.float32)                          # (P, ncls, mid)
    bf = bf_ref[...].astype(jnp.float32)                          # (P, 1, ncls)

    # 1x1 conv on a 1x1 feature map == matmul; contract C, batch over parts.
    h = lax.dot_general(g, wc, (((2,), (2,)), ((0,), (0,))),
                        preferred_element_type=jnp.float32)       # (P, bt, mid)
    # Classifier head; contract mid, batch over parts.
    s = lax.dot_general(h, wf, (((2,), (2,)), ((0,), (0,))),
                        preferred_element_type=jnp.float32) + bf  # (P, bt, ncls)

    out = jnp.concatenate([h, s], axis=-1)                        # (P, bt, mid+ncls)
    out_ref[...] = jnp.transpose(out, (1, 0, 2)).astype(out_ref.dtype)


def _pick_batch_tile(batch, channels, q, itemsize, budget_bytes):
    """Largest divisor of `batch` whose (padded) input tile fits the budget."""
    padded_c = ((channels + 7) // 8) * 8
    padded_q = ((q + 127) // 128) * 128
    per_row = padded_c * padded_q * itemsize
    for cand in range(batch, 0, -1):
        if batch % cand == 0 and cand * per_row <= budget_bytes:
            return cand
    return 1


def pcb_neck_forward(x, conv_w, fc_w, fc_b, part_num):
    """x: (B, C, H, W) NCHW.  conv_w: (P, mid, C), fc_w: (P, ncls, mid),
    fc_b: (P, ncls).  Returns (scores_list, last_feat) like the training-mode
    PyTorch forward (with dropout disabled); eval-mode result is last_feat."""
    B, C, H, W = x.shape
    assert H % part_num == 0, "H must be divisible by part_num"
    Hp = H // part_num
    S = Hp * W                 # per-part spatial extent
    Q = part_num * S           # == H * W (full lane-dense spatial axis)
    mid = conv_w.shape[1]
    ncls = fc_w.shape[1]
    F = mid + ncls

    # Free reshape of NCHW — no transpose, no extra HBM pass.
    xq = x.reshape(B, C, Q)

    # Tiny (Q, P) 0/1 segment matrix: seg[q, p] = 1 iff spatial index q belongs
    # to part p.  Built once in the wrapper; resident across grid steps.
    part_of_q = jnp.arange(Q, dtype=jnp.int32) // S
    seg = (part_of_q[:, None] ==
           jnp.arange(part_num, dtype=jnp.int32)[None, :]).astype(x.dtype)

    bf = fc_b.reshape(part_num, 1, ncls)

    itemsize = jnp.dtype(x.dtype).itemsize
    bt = _pick_batch_tile(B, C, Q, itemsize, budget_bytes=6 * 1024 * 1024)
    grid = (B // bt,)

    out = pl.pallas_call(
        functools.partial(_pcb_neck_kernel, inv_s=1.0 / float(S)),
        out_shape=jax.ShapeDtypeStruct((B, part_num, F), jnp.float32),
        grid_spec=pltpu.PrefetchScalarGridSpec(
            num_scalar_prefetch=0,
            grid=grid,
            in_specs=[
                pl.BlockSpec((bt, C, Q), lambda b: (b, 0, 0)),
                pl.BlockSpec((Q, part_num), lambda b: (0, 0)),
                pl.BlockSpec((part_num, mid, C), lambda b: (0, 0, 0)),
                pl.BlockSpec((part_num, ncls, mid), lambda b: (0, 0, 0)),
                pl.BlockSpec((part_num, 1, ncls), lambda b: (0, 0, 0)),
            ],
            out_specs=pl.BlockSpec((bt, part_num, F), lambda b: (b, 0, 0)),
        ),
        compiler_params=pltpu.CompilerParams(
            dimension_semantics=("parallel",),
            vmem_limit_bytes=32 * 1024 * 1024,
        ),
    )(xq, seg, conv_w, fc_w, bf)

    feat = out[:, :, :mid]                     # (B, P, mid)   float32
    scores = out[:, :, mid:]                   # (B, P, ncls)  float32
    # torch.cat(vector_h, dim=-1) -> (B, P * mid)
    last_feat = feat.reshape(B, part_num * mid)
    score_list = [scores[:, p, :] for p in range(part_num)]
    return score_list, last_feat


def _reference_forward(x, conv_w, fc_w, fc_b, part_num):
    """Plain-JAX reference mirroring the PyTorch forward (eval dropout)."""
    parts = jnp.split(x, part_num, axis=2)
    hs, ss = [], []
    for p in range(part_num):
        g = jnp.mean(parts[p], axis=(2, 3))                    # (B, C)
        h = g @ conv_w[p].T                                    # (B, mid)
        s = h @ fc_w[p].T + fc_b[p]                            # (B, ncls)
        hs.append(h)
        ss.append(s)
    return ss, jnp.concatenate(hs, axis=-1)


if __name__ == "__main__":
    # Small shapes consistent with the module.
    B, C, H, W = 2, 32, 16, 8          # NCHW input
    part_num = 4
    mid_planes = 32
    num_class = 16

    key = jax.random.PRNGKey(0)
    kx, kc, kf, kb = jax.random.split(key, 4)

    x = jax.random.normal(kx, (B, C, H, W), dtype=jnp.float32)
    # nn.Conv2d(in_planes, mid, 1, bias=False).weight: (mid, C, 1, 1) -> (mid, C)
    conv_w = 0.05 * jax.random.normal(kc, (part_num, mid_planes, C),
                                      dtype=jnp.float32)
    # nn.Linear(mid, num_class): weight (num_class, mid), bias (num_class,)
    fc_w = 0.05 * jax.random.normal(kf, (part_num, num_class, mid_planes),
                                    dtype=jnp.float32)
    fc_b = 0.01 * jax.random.normal(kb, (part_num, num_class),
                                    dtype=jnp.float32)

    scores, last_feat = pcb_neck_forward(x, conv_w, fc_w, fc_b, part_num)
    jax.block_until_ready(last_feat)
    jax.block_until_ready(scores)

    # Sanity check against a plain-JAX reference.
    ref_scores, ref_feat = _reference_forward(x, conv_w, fc_w, fc_b, part_num)
    assert last_feat.shape == (B, part_num * mid_planes)
    assert all(s.shape == (B, num_class) for s in scores)
    assert jnp.allclose(last_feat, ref_feat, atol=1e-4, rtol=1e-4)
    for s, rs in zip(scores, ref_scores):
        assert jnp.allclose(s, rs, atol=1e-4, rtol=1e-4)

    print("KERNEL_OK")
</pallas_src>

<mosaic_0001>
module attributes {stable_mosaic.version = 11 : i64} {
  func.func @_pcb_neck_kernel(%arg0: i32, %arg1: memref<2x32x128xf32, #tpu.memory_space<vmem>>, %arg2: memref<128x4xf32, #tpu.memory_space<vmem>>, %arg3: memref<4x32x32xf32, #tpu.memory_space<vmem>>, %arg4: memref<4x16x32xf32, #tpu.memory_space<vmem>>, %arg5: memref<4x1x16xf32, #tpu.memory_space<vmem>>, %arg6: memref<2x4x48xf32, #tpu.memory_space<vmem>>) attributes {dimension_semantics = [#tpu.dimension_semantics<parallel>], iteration_bounds = array<i64: 1>, scalar_prefetch = 0 : i64, scratch_operands = 0 : i64, tpu.core_type = #tpu.core_type<tc>, window_params = [{transform_indices = @transform_0, window_bounds = array<i64: 2, 32, 128>}, {pipeline_mode = #tpu.pipeline_mode<synchronous>, transform_indices = @transform_1, window_bounds = array<i64: 128, 4>}, {pipeline_mode = #tpu.pipeline_mode<synchronous>, transform_indices = @transform_2, window_bounds = array<i64: 4, 32, 32>}, {pipeline_mode = #tpu.pipeline_mode<synchronous>, transform_indices = @transform_3, window_bounds = array<i64: 4, 16, 32>}, {pipeline_mode = #tpu.pipeline_mode<synchronous>, transform_indices = @transform_4, window_bounds = array<i64: 4, 1, 16>}, {transform_indices = @transform_5, window_bounds = array<i64: 2, 4, 48>}]} {
    %c0 = arith.constant 0 : index
    %c0_0 = arith.constant 0 : index
    %c0_1 = arith.constant 0 : index
    %0 = vector.load %arg1[%c0, %c0_0, %c0_1] : memref<2x32x128xf32, #tpu.memory_space<vmem>>, vector<2x32x128xf32>
    %c0_2 = arith.constant 0 : index
    %c0_3 = arith.constant 0 : index
    %1 = vector.load %arg2[%c0_2, %c0_3] : memref<128x4xf32, #tpu.memory_space<vmem>>, vector<128x4xf32>
    %cst = arith.constant dense<0.000000e+00> : vector<2x32x4xf32>
    %2 = tpu.matmul %0, %1, %cst {dimension_numbers = #tpu.dot_dimension_numbers<[2], [0], [0, 1], [1], [0, 0, 0, 1, 1, 1], [], []>} : vector<2x32x128xf32>, vector<128x4xf32>, vector<2x32x4xf32> -> vector<2x32x4xf32>
    %cst_4 = arith.constant 3.125000e-02 : f32
    %3 = vector.broadcast %cst_4 : f32 to vector<2x32x4xf32>
    %4 = arith.mulf %2, %3 : vector<2x32x4xf32>
    %5 = tpu.transpose %4, [2, 0, 1] : vector<2x32x4xf32> -> vector<4x2x32xf32>
    %c0_5 = arith.constant 0 : index
    %c0_6 = arith.constant 0 : index
    %c0_7 = arith.constant 0 : index
    %6 = vector.load %arg3[%c0_5, %c0_6, %c0_7] : memref<4x32x32xf32, #tpu.memory_space<vmem>>, vector<4x32x32xf32>
    %c0_8 = arith.constant 0 : index
    %c0_9 = arith.constant 0 : index
    %c0_10 = arith.constant 0 : index
    %7 = vector.load %arg4[%c0_8, %c0_9, %c0_10] : memref<4x16x32xf32, #tpu.memory_space<vmem>>, vector<4x16x32xf32>
    %c0_11 = arith.constant 0 : index
    %c0_12 = arith.constant 0 : index
    %c0_13 = arith.constant 0 : index
    %8 = vector.load %arg5[%c0_11, %c0_12, %c0_13] : memref<4x1x16xf32, #tpu.memory_space<vmem>>, vector<4x1x16xf32>
    %cst_14 = arith.constant dense<0.000000e+00> : vector<4x2x32xf32>
    %9 = tpu.matmul %5, %6, %cst_14 {dimension_numbers = #tpu.dot_dimension_numbers<[2], [2], [1], [1], [0, 0, 0, 1, 1, 1], [0], [0]>} : vector<4x2x32xf32>, vector<4x32x32xf32>, vector<4x2x32xf32> -> vector<4x2x32xf32>
    %cst_15 = arith.constant dense<0.000000e+00> : vector<4x2x16xf32>
    %10 = tpu.matmul %9, %7, %cst_15 {dimension_numbers = #tpu.dot_dimension_numbers<[2], [2], [1], [1], [0, 0, 0, 1, 1, 1], [0], [0]>} : vector<4x2x32xf32>, vector<4x16x32xf32>, vector<4x2x16xf32> -> vector<4x2x16xf32>
    %11 = vector.broadcast %8 : vector<4x1x16xf32> to vector<4x2x16xf32>
    %12 = arith.addf %10, %11 : vector<4x2x16xf32>
    %13 = tpu.concatenate %9, %12 in 2 : vector<4x2x32xf32>, vector<4x2x16xf32> -> vector<4x2x48xf32>
    %14 = tpu.transpose %13, [1, 0, 2] : vector<4x2x48xf32> -> vector<2x4x48xf32>
    %c0_16 = arith.constant 0 : index
    %c0_17 = arith.constant 0 : index
    %c0_18 = arith.constant 0 : index
    %15 = vector.load %arg6[%c0_16, %c0_17, %c0_18] : memref<2x4x48xf32, #tpu.memory_space<vmem>>, vector<2x4x48xf32>
    tpu.vector_store %arg6[%c0_16, %c0_17, %c0_18], %14 {strides = array<i32>} : memref<2x4x48xf32, #tpu.memory_space<vmem>>, vector<2x4x48xf32>,
    return
  }
  func.func @transform_0(%arg0: i32) -> (i32, i32, i32) {
    %c0_i32 = arith.constant 0 : i32
    %c0_i32_0 = arith.constant 0 : i32
    %c0_i32_1 = arith.constant 0 : i32
    return %arg0, %c0_i32, %c0_i32_0 : i32, i32, i32
  }
  func.func @transform_1(%arg0: i32) -> (i32, i32) {
    %c0_i32 = arith.constant 0 : i32
    %c0_i32_0 = arith.constant 0 : i32
    %c0_i32_1 = arith.constant 0 : i32
    return %c0_i32, %c0_i32_0 : i32, i32
  }
  func.func @transform_2(%arg0: i32) -> (i32, i32, i32) {
    %c0_i32 = arith.constant 0 : i32
    %c0_i32_0 = arith.constant 0 : i32
    %c0_i32_1 = arith.constant 0 : i32
    %c0_i32_2 = arith.constant 0 : i32
    return %c0_i32, %c0_i32_0, %c0_i32_1 : i32, i32, i32
  }
  func.func @transform_3(%arg0: i32) -> (i32, i32, i32) {
    %c0_i32 = arith.constant 0 : i32
    %c0_i32_0 = arith.constant 0 : i32
    %c0_i32_1 = arith.constant 0 : i32
    %c0_i32_2 = arith.constant 0 : i32
    return %c0_i32, %c0_i32_0, %c0_i32_1 : i32, i32, i32
  }
  func.func @transform_4(%arg0: i32) -> (i32, i32, i32) {
    %c0_i32 = arith.constant 0 : i32
    %c0_i32_0 = arith.constant 0 : i32
    %c0_i32_1 = arith.constant 0 : i32
    %c0_i32_2 = arith.constant 0 : i32
    return %c0_i32, %c0_i32_0, %c0_i32_1 : i32, i32, i32
  }
  func.func @transform_5(%arg0: i32) -> (i32, i32, i32) {
    %c0_i32 = arith.constant 0 : i32
    %c0_i32_0 = arith.constant 0 : i32
    %c0_i32_1 = arith.constant 0 : i32
    return %arg0, %c0_i32, %c0_i32_0 : i32, i32, i32
  }
}

</mosaic_0001>

<llo_original>
// kernel: tpu_custom_call.1
$region0: #{tpu_custom_call.1}
  #allocation0 [shape = 'u32[]', space=smem, size = 0x4, offset = 0x4, fixed_abs, tag = 'smem constant byte address 0x4 - core index']
  #allocation1 [shape = 'u32[144,128]{1,0:T(1,128)}', space=vmem, size = 0x12000, scoped, tag = 'internal scratch']
  %s0 = inlined_call_operand.hbm [shape: f32[2,32,128], index: 0, kind: input, shape index: {}]
  %s1 = inlined_call_operand.vmem [shape: f32[128,4], index: 1, kind: input, shape index: {}]
  %s2 = inlined_call_operand.vmem [shape: f32[4,32,32], index: 2, kind: input, shape index: {}]
  %s3 = inlined_call_operand.hbm [shape: f32[4,16,32], index: 3, kind: input, shape index: {}]
  %s4 = inlined_call_operand.vmem [shape: f32[4,1,16], index: 4, kind: input, shape index: {}]
  %s5 = inlined_call_operand.hbm [shape: f32[2,4,48], index: 5, kind: output, shape index: {}]
  %s6 = sld [smem:[#allocation0]]
  $region38: #{tpu_custom_call.1} parent=0
    _
  %s8 = ssub.s32 1, %s6
  %s9 = scalar_select 0, %s8, %s6
  $region1: #{tpu_custom_call.1} parent=0
    #allocation2 [shape = 'u8[32768]{0}', space=vmem, size = 0x8000, scoped, tag = 'input window, operand 0, single buffered']
    #allocation3 [shape = 's32[1]{0}', space=sflag, size = 0x4, scoped, tag = 'scoped memory for tpu_custom_call.1']
    #allocation4 [shape = 's32[1]{0}', space=sflag, size = 0x4, scoped, tag = 'scoped memory for tpu_custom_call.1']
    #allocation5 [shape = 'u8[32768]{0}', space=vmem, size = 0x8000, scoped, tag = 'input window, operand 3, single buffered']
    #allocation6 [shape = 's32[1]{0}', space=sflag, size = 0x4, scoped, tag = 'scoped memory for tpu_custom_call.1']
    #allocation7 [shape = 'u8[4096]{0}', space=vmem, size = 0x1000, scoped, tag = 'output window, operand 0, single buffered']
    %10 = vsyncpa [#allocation3], 0
    %11 = vsyncpa [#allocation6], 0
    %12 = vsyncpa [#allocation4], 0
    // Predicated region
    $region2: #{tpu_custom_call.1} parent=1 // pred_check
      _
    $region3: #{tpu_custom_call.1} parent=1 // pred_check_branch
      %14 = sbr.rel (0) target = $region5
    $region4: #{tpu_custom_call.1} parent=1 // pred_region
      %s16 = ssub.s32 1024, 1024
      %17 = vsyncadd [#allocation3], %s16
      %s18 = sshll.u32 [#allocation2], 4
      %s19 = int_to_ptr.vmem [resolvable:$true] %s18
      %24 = dma.hbm_to_vmem [thread:$0]  %s0, 1024, %s19, [#allocation3], 128, 128, 8
    $region5: #{tpu_custom_call.1} parent=1 // pred_fallthru
      _
    // Predicated region
    $region6: #{tpu_custom_call.1} parent=1 // pred_check
      _
    $region7: #{tpu_custom_call.1} parent=1 // pred_check_branch
      %26 = sbr.rel (0) target = $region9
    $region8: #{tpu_custom_call.1} parent=1 // pred_region
      _
    $region9: #{tpu_custom_call.1} parent=1 // pred_fallthru
      _
    // Predicated region
    $region10: #{tpu_custom_call.1} parent=1 // pred_check
      _
    $region11: #{tpu_custom_call.1} parent=1 // pred_check_branch
      %28 = sbr.rel (0) target = $region13
    $region12: #{tpu_custom_call.1} parent=1 // pred_region
      _
    $region13: #{tpu_custom_call.1} parent=1 // pred_fallthru
      _
    // Predicated region
    $region14: #{tpu_custom_call.1} parent=1 // pred_check
      _
    $region15: #{tpu_custom_call.1} parent=1 // pred_check_branch
      %30 = sbr.rel (0) target = $region17
    $region16: #{tpu_custom_call.1} parent=1 // pred_region
      %s32 = ssub.s32 1024, 1024
      %33 = vsyncadd [#allocation6], %s32
      %s34 = sshll.u32 [#allocation5], 4
      %s35 = int_to_ptr.vmem [resolvable:$true] %s34
      %40 = dma.hbm_to_vmem [thread:$0]  %s3, 1024, %s35, [#allocation6], 128, 128, 8
    $region17: #{tpu_custom_call.1} parent=1 // pred_fallthru
      _
    // Predicated region
    $region18: #{tpu_custom_call.1} parent=1 // pred_check
      _
    $region19: #{tpu_custom_call.1} parent=1 // pred_check_branch
      %42 = sbr.rel (0) target = $region21
    $region20: #{tpu_custom_call.1} parent=1 // pred_region
      _
    $region21: #{tpu_custom_call.1} parent=1 // pred_fallthru
      _
    // Predicated region
    $region22: #{tpu_custom_call.1} parent=1 // pred_check
      _
    $region23: #{tpu_custom_call.1} parent=1 // pred_check_branch
      %44 = sbr.rel (0) target = $region25
    $region24: #{tpu_custom_call.1} parent=1 // pred_region
      %45 = dma.done [#allocation3], 1024
    $region25: #{tpu_custom_call.1} parent=1 // pred_fallthru
      _
    // Predicated region
    $region26: #{tpu_custom_call.1} parent=1 // pred_check
      _
    $region27: #{tpu_custom_call.1} parent=1 // pred_check_branch
      %47 = sbr.rel (0) target = $region29
    $region28: #{tpu_custom_call.1} parent=1 // pred_region
      %48 = dma.done [#allocation6], 1024
    $region29: #{tpu_custom_call.1} parent=1 // pred_fallthru
      _
    %v49 = vld [vmem:[#allocation2] sm:$0xff]
    %v50 = vld [vmem:[#allocation2 + $0x8] sm:$0xff]
    %v51 = vld [vmem:[#allocation2 + $0x10] sm:$0xff]
    %v52 = vld [vmem:[#allocation2 + $0x18] sm:$0xff]
    %v53 = vld [vmem:[#allocation2 + $0x20] sm:$0xff]
    %v54 = vld [vmem:[#allocation2 + $0x28] sm:$0xff]
    %v55 = vld [vmem:[#allocation2 + $0x30] sm:$0xff]
    %v56 = vld [vmem:[#allocation2 + $0x38] sm:$0xff]
    %v57 = vld [vmem:[%s1] sm:$0xff]
    %v58 = vld [vmem:[%s1 + $0x8] sm:$0xff]
    %v59 = vld [vmem:[%s1 + $0x10] sm:$0xff]
    %v60 = vld [vmem:[%s1 + $0x18] sm:$0xff]
    %v61 = vld [vmem:[%s1 + $0x20] sm:$0xff]
    %v62 = vld [vmem:[%s1 + $0x28] sm:$0xff]
    %v63 = vld [vmem:[%s1 + $0x30] sm:$0xff]
    %v64 = vld [vmem:[%s1 + $0x38] sm:$0xff]
    %v65 = vld [vmem:[%s1 + $0x40] sm:$0xff]
    %v66 = vld [vmem:[%s1 + $0x48] sm:$0xff]
    %v67 = vld [vmem:[%s1 + $0x50] sm:$0xff]
    %v68 = vld [vmem:[%s1 + $0x58] sm:$0xff]
    %v69 = vld [vmem:[%s1 + $0x60] sm:$0xff]
    %v70 = vld [vmem:[%s1 + $0x68] sm:$0xff]
    %v71 = vld [vmem:[%s1 + $0x70] sm:$0xff]
    %v72 = vld [vmem:[%s1 + $0x78] sm:$0xff]
    %73 = vmatprep.subr.mxu0 0.0
    %74 = vmatpush1.msra.mxu0 %v57
    %75 = vmatprep.subr.mxu0 0.0
    %76 = vmatpush1.msra.mxu0 %v58
    %77 = vmatprep.subr.mxu0 0.0
    %78 = vmatpush1.msra.mxu0 %v59
    %79 = vmatprep.subr.mxu0 0.0
    %80 = vmatpush1.msra.mxu0 %v60
    %81 = vmatprep.subr.mxu0 0.0
    %82 = vmatpush1.msra.mxu0 %v61
    %83 = vmatprep.subr.mxu0 0.0
    %84 = vmatpush1.msra.mxu0 %v62
    %85 = vmatprep.subr.mxu0 0.0
    %86 = vmatpush1.msra.mxu0 %v63
    %87 = vmatprep.subr.mxu0 0.0
    %88 = vmatpush1.msra.mxu0 %v64
    %89 = vmatprep.subr.mxu0 0.0
    %90 = vmatpush1.msra.mxu0 %v65
    %91 = vmatprep.subr.mxu0 0.0
    %92 = vmatpush1.msra.mxu0 %v66
    %93 = vmatprep.subr.mxu0 0.0
    %94 = vmatpush1.msra.mxu0 %v67
    %95 = vmatprep.subr.mxu0 0.0
    %96 = vmatpush1.msra.mxu0 %v68
    %97 = vmatprep.subr.mxu0 0.0
    %98 = vmatpush1.msra.mxu0 %v69
    %99 = vmatprep.subr.mxu0 0.0
    %100 = vmatpush1.msra.mxu0 %v70
    %101 = vmatprep.subr.mxu0 0.0
    %102 = vmatpush1.msra.mxu0 %v71
    %103 = vmatprep.subr.mxu0 0.0
    %104 = vmatpush1.msra.mxu0 %v72
    %105 = vmatprep.subr.mxu0 0.0
    %106 = vmatpush1.msra.mxu0 0.0
    %107 = vmatprep.subr.mxu0 0.0
    %108 = vmatpush1.msra.mxu0 0.0
    %109 = vmatprep.subr.mxu0 0.0
    %110 = vmatpush1.msra.mxu0 0.0
    %111 = vmatprep.subr.mxu0 0.0
    %112 = vmatpush1.msra.mxu0 0.0
    %113 = vmatprep.subr.mxu0 0.0
    %114 = vmatpush1.msra.mxu0 0.0
    %115 = vmatprep.subr.mxu0 0.0
    %116 = vmatpush1.msra.mxu0 0.0
    %117 = vmatprep.subr.mxu0 0.0
    %118 = vmatpush1.msra.mxu0 0.0
    %119 = vmatprep.subr.mxu0 0.0
    %120 = vmatpush1.msra.mxu0 0.0
    %121 = vmatprep.subr.mxu0 0.0
    %122 = vmatpush1.msra.mxu0 0.0
    %123 = vmatprep.subr.mxu0 0.0
    %124 = vmatpush1.msra.mxu0 0.0
    %125 = vmatprep.subr.mxu0 0.0
    %126 = vmatpush1.msra.mxu0 0.0
    %127 = vmatprep.subr.mxu0 0.0
    %128 = vmatpush1.msra.mxu0 0.0
    %129 = vmatprep.subr.mxu0 0.0
    %130 = vmatpush1.msra.mxu0 0.0
    %131 = vmatprep.subr.mxu0 0.0
    %132 = vmatpush1.msra.mxu0 0.0
    %133 = vmatprep.subr.mxu0 0.0
    %134 = vmatpush1.msra.mxu0 0.0
    %135 = vmatprep.subr.mxu0 0.0
    %136 = vmatpush1.msra.mxu0 0.0
    %137 = vmatprep.mubr.f32.mxu0 0.0
    %138 = vmatmul.mubr.f32.gmra.mrb[0].mxu0 %v49
    %v139 = vpop.f32.mrb[0].mxu0
    %v140 = vadd.f32 0.0, %v139
    %v141 = vpop.f32.mrb[0].mxu0
    %142 = vmatprep.mubr.f32.mxu0 0.0
    %143 = vmatmul.mubr.f32.gmra.mrb[0].mxu0 %v50
    %v144 = vpop.f32.mrb[0].mxu0
    %v145 = vadd.f32 0.0, %v144
    %v146 = vpop.f32.mrb[0].mxu0
    %147 = vmatprep.mubr.f32.mxu0 0.0
    %148 = vmatmul.mubr.f32.gmra.mrb[0].mxu0 %v51
    %v149 = vpop.f32.mrb[0].mxu0
    %v150 = vadd.f32 0.0, %v149
    %v151 = vpop.f32.mrb[0].mxu0
    %152 = vmatprep.mubr.f32.mxu0 0.0
    %153 = vmatmul.mubr.f32.gmra.mrb[0].mxu0 %v52
    %v154 = vpop.f32.mrb[0].mxu0
    %v155 = vadd.f32 0.0, %v154
    %v156 = vpop.f32.mrb[0].mxu0
    %157 = vmatprep.mubr.f32.mxu0 0.0
    %158 = vmatmul.mubr.f32.gmra.mrb[0].mxu0 %v53
    %v159 = vpop.f32.mrb[0].mxu0
    %v160 = vadd.f32 0.0, %v159
    %v161 = vpop.f32.mrb[0].mxu0
    %162 = vmatprep.mubr.f32.mxu0 0.0
    %163 = vmatmul.mubr.f32.gmra.mrb[0].mxu0 %v54
    %v164 = vpop.f32.mrb[0].mxu0
    %v165 = vadd.f32 0.0, %v164
    %v166 = vpop.f32.mrb[0].mxu0
    %167 = vmatprep.mubr.f32.mxu0 0.0
    %168 = vmatmul.mubr.f32.gmra.mrb[0].mxu0 %v55
    %v169 = vpop.f32.mrb[0].mxu0
    %v170 = vadd.f32 0.0, %v169
    %v171 = vpop.f32.mrb[0].mxu0
    %172 = vmatprep.mubr.f32.mxu0 0.0
    %173 = vmatmul.mubr.f32.gmra.mrb[0].mxu0 %v56
    %v174 = vpop.f32.mrb[0].mxu0
    %v175 = vadd.f32 0.0, %v174
    %v176 = vpop.f32.mrb[0].mxu0
    %177 = vdwg.mxu0
    %v178 = vmul.f32 %v140, 0.03125
    %v179 = vmul.f32 %v145, 0.03125
    %v180 = vmul.f32 %v150, 0.03125
    %v181 = vmul.f32 %v155, 0.03125
    %v182 = vmul.f32 %v160, 0.03125
    %v183 = vmul.f32 %v165, 0.03125
    %v184 = vmul.f32 %v170, 0.03125
    %v185 = vmul.f32 %v175, 0.03125
    %186 = vxpose.xlu0.b32.start [1/16] %v178, 128
    %187 = vxpose.xlu0.b32.cont [2/16] %v179, 128
    %188 = vxpose.xlu0.b32.cont [3/16] %v180, 128
    %189 = vxpose.xlu0.b32.cont [4/16] %v181, 128
    %190 = vxpose.xlu0.b32.cont [5/16] 0.0, 128
    %191 = vxpose.xlu0.b32.cont [6/16] 0.0, 128
    %192 = vxpose.xlu0.b32.cont [7/16] 0.0, 128
    %193 = vxpose.xlu0.b32.cont [8/16] 0.0, 128
    %194 = vxpose.xlu0.b32.cont [9/16] 0.0, 128
    %195 = vxpose.xlu0.b32.cont [10/16] 0.0, 128
    %196 = vxpose.xlu0.b32.cont [11/16] 0.0, 128
    %197 = vxpose.xlu0.b32.cont [12/16] 0.0, 128
    %198 = vxpose.xlu0.b32.cont [13/16] 0.0, 128
    %199 = vxpose.xlu0.b32.cont [14/16] 0.0, 128
    %200 = vxpose.xlu0.b32.cont [15/16] 0.0, 128
    %201 = vxpose.xlu0.b32.end [16/16] 0.0, 128
    %v202 = vpop.trf.xlu0
    %v203 = vpop.trf.xlu0
    %v204 = vpop.trf.xlu0
    %v205 = vpop.trf.xlu0
    %v206 = vpop.trf.xlu0
    %v207 = vpop.trf.xlu0
    %v208 = vpop.trf.xlu0
    %v209 = vpop.trf.xlu0
    %v210 = vpop.trf.xlu0
    %v211 = vpop.trf.xlu0
    %v212 = vpop.trf.xlu0
    %v213 = vpop.trf.xlu0
    %v214 = vpop.trf.xlu0
    %v215 = vpop.trf.xlu0
    %v216 = vpop.trf.xlu0
    %v217 = vpop.trf.xlu0
    %218 = vxpose.xlu0.b32.start [1/16] %v182, 128
    %219 = vxpose.xlu0.b32.cont [2/16] %v183, 128
    %220 = vxpose.xlu0.b32.cont [3/16] %v184, 128
    %221 = vxpose.xlu0.b32.cont [4/16] %v185, 128
    %222 = vxpose.xlu0.b32.cont [5/16] 0.0, 128
    %223 = vxpose.xlu0.b32.cont [6/16] 0.0, 128
    %224 = vxpose.xlu0.b32.cont [7/16] 0.0, 128
    %225 = vxpose.xlu0.b32.cont [8/16] 0.0, 128
    %226 = vxpose.xlu0.b32.cont [9/16] 0.0, 128
    %227 = vxpose.xlu0.b32.cont [10/16] 0.0, 128
    %228 = vxpose.xlu0.b32.cont [11/16] 0.0, 128
    %229 = vxpose.xlu0.b32.cont [12/16] 0.0, 128
    %230 = vxpose.xlu0.b32.cont [13/16] 0.0, 128
    %231 = vxpose.xlu0.b32.cont [14/16] 0.0, 128
    %232 = vxpose.xlu0.b32.cont [15/16] 0.0, 128
    %233 = vxpose.xlu0.b32.end [16/16] 0.0, 128
    %v234 = vpop.trf.xlu0
    %v235 = vpop.trf.xlu0
    %v236 = vpop.trf.xlu0
    %v237 = vpop.trf.xlu0
    %v238 = vpop.trf.xlu0
    %v239 = vpop.trf.xlu0
    %v240 = vpop.trf.xlu0
    %v241 = vpop.trf.xlu0
    %v242 = vpop.trf.xlu0
    %v243 = vpop.trf.xlu0
    %v244 = vpop.trf.xlu0
    %v245 = vpop.trf.xlu0
    %v246 = vpop.trf.xlu0
    %v247 = vpop.trf.xlu0
    %v248 = vpop.trf.xlu0
    %v249 = vpop.trf.xlu0
    %v251 = vunpack.c.l.s4 1983009808
    %v252 = vunpack.c.0.s8 %v251
    %v253 = vlaneseq
    %v254 = vshrl.u32 %v253, 7
    %v255 = vsub.s32 %v252, %v254
    %v256 = vrot.slane %v202, %v255
    %v258 = vunpack.c.l.s4 1983009808
    %v259 = vunpack.c.0.s8 %v258
    %v260 = vlaneseq
    %v261 = vshrl.u32 %v260, 7
    %v262 = vsub.s32 %v259, %v261
    %v263 = vrot.slane %v234, %v262
    %v264 = vcombine.low %v256, %v263
    %v265 = vcombine.high %v256, %v263
    %v267 = vunpack.c.l.s4 1934713408
    %v268 = vunpack.c.0.s8 %v267
    %v269 = vlaneseq
    %v270 = vshrl.u32 %v269, 7
    %v271 = vsub.s32 %v268, %v270
    %v272 = vrot.slane %v264, %v271
    %v274 = vunpack.c.l.s4 1934713408
    %v275 = vunpack.c.0.s8 %v274
    %v276 = vlaneseq
    %v277 = vshrl.u32 %v276, 7
    %v278 = vsub.s32 %v275, %v277
    %v279 = vrot.slane %v265, %v278
    %v280 = vcombine.high %v272, 0.0
    %v281 = vcombine.high %v279, 0.0
    %v282 = vld [vmem:[%s2] sm:$0xff]
    %v283 = vld [vmem:[%s2 + $0x8] sm:$0xff]
    %v284 = vld [vmem:[%s2 + $0x10] sm:$0xff]
    %v285 = vld [vmem:[%s2 + $0x18] sm:$0xff]
    %v286 = vld [vmem:[%s2 + $0x20] sm:$0xff]
    %v287 = vld [vmem:[%s2 + $0x28] sm:$0xff]
    %v288 = vld [vmem:[%s2 + $0x30] sm:$0xff]
    %v289 = vld [vmem:[%s2 + $0x38] sm:$0xff]
    %v290 = vld [vmem:[%s2 + $0x40] sm:$0xff]
    %v291 = vld [vmem:[%s2 + $0x48] sm:$0xff]
    %v292 = vld [vmem:[%s2 + $0x50] sm:$0xff]
    %v293 = vld [vmem:[%s2 + $0x58] sm:$0xff]
    %v294 = vld [vmem:[%s2 + $0x60] sm:$0xff]
    %v295 = vld [vmem:[%s2 + $0x68] sm:$0xff]
    %v296 = vld [vmem:[%s2 + $0x70] sm:$0xff]
    %v297 = vld [vmem:[%s2 + $0x78] sm:$0xff]
    %v298 = vld [vmem:[#allocation5] sm:$0xff]
    %v299 = vld [vmem:[#allocation5 + $0x8] sm:$0xff]
    %v300 = vld [vmem:[#allocation5 + $0x10] sm:$0xff]
    %v301 = vld [vmem:[#allocation5 + $0x18] sm:$0xff]
    %v302 = vld [vmem:[#allocation5 + $0x20] sm:$0xff]
    %v303 = vld [vmem:[#allocation5 + $0x28] sm:$0xff]
    %v304 = vld [vmem:[#allocation5 + $0x30] sm:$0xff]
    %v305 = vld [vmem:[#allocation5 + $0x38] sm:$0xff]
    %v306 = vld [vmem:[%s4] sm:$0x1]
    %v307 = vld [vmem:[%s4 + $0x1] sm:$0x1]
    %v308 = vld [vmem:[%s4 + $0x2] sm:$0x1]
    %v309 = vld [vmem:[%s4 + $0x3] sm:$0x1]
    %vm310 = vcmask 261120
    %v312 = vsel %vm310, %v272, 0
    %v315 = vsel %vm310, %v282, 0
    %v318 = vsel %vm310, %v283, 0
    %v321 = vsel %vm310, %v284, 0
    %v324 = vsel %vm310, %v285, 0
    %326 = vmatprep.subr.mxu0 0.0
    %327 = vmatpush1.xpose.msra.mxu0 %v315
    %328 = vmatprep.subr.mxu0 0.0
    %329 = vmatpush1.xpose.msra.mxu0 %v318
    %330 = vmatprep.subr.mxu0 0.0
    %331 = vmatpush1.xpose.msra.mxu0 %v321
    %332 = vmatprep.subr.mxu0 0.0
    %333 = vmatpush1.xpose.msra.mxu0 %v324
    %334 = vmatprep.subr.mxu0 0.0
    %335 = vmatpush1.xpose.msra.mxu0 0.0
    %336 = vmatprep.subr.mxu0 0.0
    %337 = vmatpush1.xpose.msra.mxu0 0.0
    %338 = vmatprep.subr.mxu0 0.0
    %339 = vmatpush1.xpose.msra.mxu0 0.0
    %340 = vmatprep.subr.mxu0 0.0
    %341 = vmatpush1.xpose.msra.mxu0 0.0
    %342 = vmatprep.subr.mxu0 0.0
    %343 = vmatpush1.xpose.msra.mxu0 0.0
    %344 = vmatprep.subr.mxu0 0.0
    %345 = vmatpush1.xpose.msra.mxu0 0.0
    %346 = vmatprep.subr.mxu0 0.0
    %347 = vmatpush1.xpose.msra.mxu0 0.0
    %348 = vmatprep.subr.mxu0 0.0
    %349 = vmatpush1.xpose.msra.mxu0 0.0
    %350 = vmatprep.subr.mxu0 0.0
    %351 = vmatpush1.xpose.msra.mxu0 0.0
    %352 = vmatprep.subr.mxu0 0.0
    %353 = vmatpush1.xpose.msra.mxu0 0.0
    %354 = vmatprep.subr.mxu0 0.0
    %355 = vmatpush1.xpose.msra.mxu0 0.0
    %356 = vmatprep.subr.mxu0 0.0
    %357 = vmatpush1.xpose.msra.mxu0 0.0
    %358 = vmatprep.subr.mxu0 0.0
    %359 = vmatpush1.xpose.msra.mxu0 0.0
    %360 = vmatprep.subr.mxu0 0.0
    %361 = vmatpush1.xpose.msra.mxu0 0.0
    %362 = vmatprep.subr.mxu0 0.0
    %363 = vmatpush1.xpose.msra.mxu0 0.0
    %364 = vmatprep.subr.mxu0 0.0
    %365 = vmatpush1.xpose.msra.mxu0 0.0
    %366 = vmatprep.subr.mxu0 0.0
    %367 = vmatpush1.xpose.msra.mxu0 0.0
    %368 = vmatprep.subr.mxu0 0.0
    %369 = vmatpush1.xpose.msra.mxu0 0.0
    %370 = vmatprep.subr.mxu0 0.0
    %371 = vmatpush1.xpose.msra.mxu0 0.0
    %372 = vmatprep.subr.mxu0 0.0
    %373 = vmatpush1.xpose.msra.mxu0 0.0
    %374 = vmatprep.subr.mxu0 0.0
    %375 = vmatpush1.xpose.msra.mxu0 0.0
    %376 = vmatprep.subr.mxu0 0.0
    %377 = vmatpush1.xpose.msra.mxu0 0.0
    %378 = vmatprep.subr.mxu0 0.0
    %379 = vmatpush1.xpose.msra.mxu0 0.0
    %380 = vmatprep.subr.mxu0 0.0
    %381 = vmatpush1.xpose.msra.mxu0 0.0
    %382 = vmatprep.subr.mxu0 0.0
    %383 = vmatpush1.xpose.msra.mxu0 0.0
    %384 = vmatprep.subr.mxu0 0.0
    %385 = vmatpush1.xpose.msra.mxu0 0.0
    %386 = vmatprep.subr.mxu0 0.0
    %387 = vmatpush1.xpose.msra.mxu0 0.0
    %388 = vmatprep.subr.mxu0 0.0
    %389 = vmatpush1.xpose.msra.mxu0 0.0
    %390 = vmatprep.mubr.f32.mxu0 0.0
    %391 = vmatmul.mubr.f32.gmra.mrb[0].mxu0 %v312
    %v392 = vpop.f32.mrb[0].mxu0
    %v393 = vadd.f32 0.0, %v392
    %v394 = vpop.f32.mrb[0].mxu0
    %395 = vdwg.mxu0
    %v397 = vsel %vm310, %v280, 0
    %v400 = vsel %vm310, %v286, 0
    %v403 = vsel %vm310, %v287, 0
    %v406 = vsel %vm310, %v288, 0
    %v409 = vsel %vm310, %v289, 0
    %411 = vmatprep.subr.mxu0 0.0
    %412 = vmatpush1.xpose.msra.mxu0 %v400
    %413 = vmatprep.subr.mxu0 0.0
    %414 = vmatpush1.xpose.msra.mxu0 %v403
    %415 = vmatprep.subr.mxu0 0.0
    %416 = vmatpush1.xpose.msra.mxu0 %v406
    %417 = vmatprep.subr.mxu0 0.0
    %418 = vmatpush1.xpose.msra.mxu0 %v409
    %419 = vmatprep.subr.mxu0 0.0
    %420 = vmatpush1.xpose.msra.mxu0 0.0
    %421 = vmatprep.subr.mxu0 0.0
    %422 = vmatpush1.xpose.msra.mxu0 0.0
    %423 = vmatprep.subr.mxu0 0.0
    %424 = vmatpush1.xpose.msra.mxu0 0.0
    %425 = vmatprep.subr.mxu0 0.0
    %426 = vmatpush1.xpose.msra.mxu0 0.0
    %427 = vmatprep.subr.mxu0 0.0
    %428 = vmatpush1.xpose.msra.mxu0 0.0
    %429 = vmatprep.subr.mxu0 0.0
    %430 = vmatpush1.xpose.msra.mxu0 0.0
    %431 = vmatprep.subr.mxu0 0.0
    %432 = vmatpush1.xpose.msra.mxu0 0.0
    %433 = vmatprep.subr.mxu0 0.0
    %434 = vmatpush1.xpose.msra.mxu0 0.0
    %435 = vmatprep.subr.mxu0 0.0
    %436 = vmatpush1.xpose.msra.mxu0 0.0
    %437 = vmatprep.subr.mxu0 0.0
    %438 = vmatpush1.xpose.msra.mxu0 0.0
    %439 = vmatprep.subr.mxu0 0.0
    %440 = vmatpush1.xpose.msra.mxu0 0.0
    %441 = vmatprep.subr.mxu0 0.0
    %442 = vmatpush1.xpose.msra.mxu0 0.0
    %443 = vmatprep.subr.mxu0 0.0
    %444 = vmatpush1.xpose.msra.mxu0 0.0
    %445 = vmatprep.subr.mxu0 0.0
    %446 = vmatpush1.xpose.msra.mxu0 0.0
    %447 = vmatprep.subr.mxu0 0.0
    %448 = vmatpush1.xpose.msra.mxu0 0.0
    %449 = vmatprep.subr.mxu0 0.0
    %450 = vmatpush1.xpose.msra.mxu0 0.0
    %451 = vmatprep.subr.mxu0 0.0
    %452 = vmatpush1.xpose.msra.mxu0 0.0
    %453 = vmatprep.subr.mxu0 0.0
    %454 = vmatpush1.xpose.msra.mxu0 0.0
    %455 = vmatprep.subr.mxu0 0.0
    %456 = vmatpush1.xpose.msra.mxu0 0.0
    %457 = vmatprep.subr.mxu0 0.0
    %458 = vmatpush1.xpose.msra.mxu0 0.0
    %459 = vmatprep.subr.mxu0 0.0
    %460 = vmatpush1.xpose.msra.mxu0 0.0
    %461 = vmatprep.subr.mxu0 0.0
    %462 = vmatpush1.xpose.msra.mxu0 0.0
    %463 = vmatprep.subr.mxu0 0.0
    %464 = vmatpush1.xpose.msra.mxu0 0.0
    %465 = vmatprep.subr.mxu0 0.0
    %466 = vmatpush1.xpose.msra.mxu0 0.0
    %467 = vmatprep.subr.mxu0 0.0
    %468 = vmatpush1.xpose.msra.mxu0 0.0
    %469 = vmatprep.subr.mxu0 0.0
    %470 = vmatpush1.xpose.msra.mxu0 0.0
    %471 = vmatprep.subr.mxu0 0.0
    %472 = vmatpush1.xpose.msra.mxu0 0.0
    %473 = vmatprep.subr.mxu0 0.0
    %474 = vmatpush1.xpose.msra.mxu0 0.0
    %475 = vmatprep.mubr.f32.mxu0 0.0
    %476 = vmatmul.mubr.f32.gmra.mrb[0].mxu0 %v397
    %v477 = vpop.f32.mrb[0].mxu0
    %v478 = vadd.f32 0.0, %v477
    %v479 = vpop.f32.mrb[0].mxu0
    %480 = vdwg.mxu0
    %v482 = vsel %vm310, %v279, 0
    %v485 = vsel %vm310, %v290, 0
    %v488 = vsel %vm310, %v291, 0
    %v491 = vsel %vm310, %v292, 0
    %v494 = vsel %vm310, %v293, 0
    %496 = vmatprep.subr.mxu0 0.0
    %497 = vmatpush1.xpose.msra.mxu0 %v485
    %498 = vmatprep.subr.mxu0 0.0
    %499 = vmatpush1.xpose.msra.mxu0 %v488
    %500 = vmatprep.subr.mxu0 0.0
    %501 = vmatpush1.xpose.msra.mxu0 %v491
    %502 = vmatprep.subr.mxu0 0.0
    %503 = vmatpush1.xpose.msra.mxu0 %v494
    %504 = vmatprep.subr.mxu0 0.0
    %505 = vmatpush1.xpose.msra.mxu0 0.0
    %506 = vmatprep.subr.mxu0 0.0
    %507 = vmatpush1.xpose.msra.mxu0 0.0
    %508 = vmatprep.subr.mxu0 0.0
    %509 = vmatpush1.xpose.msra.mxu0 0.0
    %510 = vmatprep.subr.mxu0 0.0
    %511 = vmatpush1.xpose.msra.mxu0 0.0
    %512 = vmatprep.subr.mxu0 0.0
    %513 = vmatpush1.xpose.msra.mxu0 0.0
    %514 = vmatprep.subr.mxu0 0.0
    %515 = vmatpush1.xpose.msra.mxu0 0.0
    %516 = vmatprep.subr.mxu0 0.0
    %517 = vmatpush1.xpose.msra.mxu0 0.0
    %518 = vmatprep.subr.mxu0 0.0
    %519 = vmatpush1.xpose.msra.mxu0 0.0
    %520 = vmatprep.subr.mxu0 0.0
    %521 = vmatpush1.xpose.msra.mxu0 0.0
    %522 = vmatprep.subr.mxu0 0.0
    %523 = vmatpush1.xpose.msra.mxu0 0.0
    %524 = vmatprep.subr.mxu0 0.0
    %525 = vmatpush1.xpose.msra.mxu0 0.0
    %526 = vmatprep.subr.mxu0 0.0
    %527 = vmatpush1.xpose.msra.mxu0 0.0
    %528 = vmatprep.subr.mxu0 0.0
    %529 = vmatpush1.xpose.msra.mxu0 0.0
    %530 = vmatprep.subr.mxu0 0.0
    %531 = vmatpush1.xpose.msra.mxu0 0.0
    %532 = vmatprep.subr.mxu0 0.0
    %533 = vmatpush1.xpose.msra.mxu0 0.0
    %534 = vmatprep.subr.mxu0 0.0
    %535 = vmatpush1.xpose.msra.mxu0 0.0
    %536 = vmatprep.subr.mxu0 0.0
    %537 = vmatpush1.xpose.msra.mxu0 0.0
    %538 = vmatprep.subr.mxu0 0.0
    %539 = vmatpush1.xpose.msra.mxu0 0.0
    %540 = vmatprep.subr.mxu0 0.0
    %541 = vmatpush1.xpose.msra.mxu0 0.0
    %542 = vmatprep.subr.mxu0 0.0
    %543 = vmatpush1.xpose.msra.mxu0 0.0
    %544 = vmatprep.subr.mxu0 0.0
    %545 = vmatpush1.xpose.msra.mxu0 0.0
    %546 = vmatprep.subr.mxu0 0.0
    %547 = vmatpush1.xpose.msra.mxu0 0.0
    %548 = vmatprep.subr.mxu0 0.0
    %549 = vmatpush1.xpose.msra.mxu0 0.0
    %550 = vmatprep.subr.mxu0 0.0
    %551 = vmatpush1.xpose.msra.mxu0 0.0
    %552 = vmatprep.subr.mxu0 0.0
    %553 = vmatpush1.xpose.msra.mxu0 0.0
    %554 = vmatprep.subr.mxu0 0.0
    %555 = vmatpush1.xpose.msra.mxu0 0.0
    %556 = vmatprep.subr.mxu0 0.0
    %557 = vmatpush1.xpose.msra.mxu0 0.0
    %558 = vmatprep.subr.mxu0 0.0
    %559 = vmatpush1.xpose.msra.mxu0 0.0
    %560 = vmatprep.mubr.f32.mxu0 0.0
    %561 = vmatmul.mubr.f32.gmra.mrb[0].mxu0 %v482
    %v562 = vpop.f32.mrb[0].mxu0
    %v563 = vadd.f32 0.0, %v562
    %v564 = vpop.f32.mrb[0].mxu0
    %565 = vdwg.mxu0
    %v567 = vsel %vm310, %v281, 0
    %v570 = vsel %vm310, %v294, 0
    %v573 = vsel %vm310, %v295, 0
    %v576 = vsel %vm310, %v296, 0
    %v579 = vsel %vm310, %v297, 0
    %581 = vmatprep.subr.mxu0 0.0
    %582 = vmatpush1.xpose.msra.mxu0 %v570
    %583 = vmatprep.subr.mxu0 0.0
    %584 = vmatpush1.xpose.msra.mxu0 %v573
    %585 = vmatprep.subr.mxu0 0.0
    %586 = vmatpush1.xpose.msra.mxu0 %v576
    %587 = vmatprep.subr.mxu0 0.0
    %588 = vmatpush1.xpose.msra.mxu0 %v579
    %589 = vmatprep.subr.mxu0 0.0
    %590 = vmatpush1.xpose.msra.mxu0 0.0
    %591 = vmatprep.subr.mxu0 0.0
    %592 = vmatpush1.xpose.msra.mxu0 0.0
    %593 = vmatprep.subr.mxu0 0.0
    %594 = vmatpush1.xpose.msra.mxu0 0.0
    %595 = vmatprep.subr.mxu0 0.0
    %596 = vmatpush1.xpose.msra.mxu0 0.0
    %597 = vmatprep.subr.mxu0 0.0
    %598 = vmatpush1.xpose.msra.mxu0 0.0
    %599 = vmatprep.subr.mxu0 0.0
    %600 = vmatpush1.xpose.msra.mxu0 0.0
    %601 = vmatprep.subr.mxu0 0.0
    %602 = vmatpush1.xpose.msra.mxu0 0.0
    %603 = vmatprep.subr.mxu0 0.0
    %604 = vmatpush1.xpose.msra.mxu0 0.0
    %605 = vmatprep.subr.mxu0 0.0
    %606 = vmatpush1.xpose.msra.mxu0 0.0
    %607 = vmatprep.subr.mxu0 0.0
    %608 = vmatpush1.xpose.msra.mxu0 0.0
    %609 = vmatprep.subr.mxu0 0.0
    %610 = vmatpush1.xpose.msra.mxu0 0.0
    %611 = vmatprep.subr.mxu0 0.0
    %612 = vmatpush1.xpose.msra.mxu0 0.0
    %613 = vmatprep.subr.mxu0 0.0
    %614 = vmatpush1.xpose.msra.mxu0 0.0
    %615 = vmatprep.subr.mxu0 0.0
    %616 = vmatpush1.xpose.msra.mxu0 0.0
    %617 = vmatprep.subr.mxu0 0.0
    %618 = vmatpush1.xpose.msra.mxu0 0.0
    %619 = vmatprep.subr.mxu0 0.0
    %620 = vmatpush1.xpose.msra.mxu0 0.0
    %621 = vmatprep.subr.mxu0 0.0
    %622 = vmatpush1.xpose.msra.mxu0 0.0
    %623 = vmatprep.subr.mxu0 0.0
    %624 = vmatpush1.xpose.msra.mxu0 0.0
    %625 = vmatprep.subr.mxu0 0.0
    %626 = vmatpush1.xpose.msra.mxu0 0.0
    %627 = vmatprep.subr.mxu0 0.0
    %628 = vmatpush1.xpose.msra.mxu0 0.0
    %629 = vmatprep.subr.mxu0 0.0
    %630 = vmatpush1.xpose.msra.mxu0 0.0
    %631 = vmatprep.subr.mxu0 0.0
    %632 = vmatpush1.xpose.msra.mxu0 0.0
    %633 = vmatprep.subr.mxu0 0.0
    %634 = vmatpush1.xpose.msra.mxu0 0.0
    %635 = vmatprep.subr.mxu0 0.0
    %636 = vmatpush1.xpose.msra.mxu0 0.0
    %637 = vmatprep.subr.mxu0 0.0
    %638 = vmatpush1.xpose.msra.mxu0 0.0
    %639 = vmatprep.subr.mxu0 0.0
    %640 = vmatpush1.xpose.msra.mxu0 0.0
    %641 = vmatprep.subr.mxu0 0.0
    %642 = vmatpush1.xpose.msra.mxu0 0.0
    %643 = vmatprep.subr.mxu0 0.0
    %644 = vmatpush1.xpose.msra.mxu0 0.0
    %645 = vmatprep.mubr.f32.mxu0 0.0
    %646 = vmatmul.mubr.f32.gmra.mrb[0].mxu0 %v567
    %v647 = vpop.f32.mrb[0].mxu0
    %v648 = vadd.f32 0.0, %v647
    %v649 = vpop.f32.mrb[0].mxu0
    %650 = vdwg.mxu0
    %v655 = vlaneseq
    %v656 = vshrl.u32 %v655, 7
    %v657 = vsub.s32 0, %v656
    %v658 = vrot.slane %v306, %v657
    %v659 = vlaneseq
    %v660 = vshrl.u32 %v659, 7
    %v661 = vsub.s32 0, %v660
    %v662 = vrot.slane %v307, %v661
    %v663 = vlaneseq
    %v664 = vshrl.u32 %v663, 7
    %v665 = vsub.s32 0, %v664
    %v666 = vrot.slane %v308, %v665
    %v667 = vlaneseq
    %v668 = vshrl.u32 %v667, 7
    %v669 = vsub.s32 0, %v668
    %v670 = vrot.slane %v309, %v669
    %v676 = vsel %vm310, %v393, 0
    %v679 = vsel %vm310, %v298, 0
    %v682 = vsel %vm310, %v299, 0
    %684 = vmatprep.subr.mxu0 0.0
    %685 = vmatpush1.xpose.msra.mxu0 %v679
    %686 = vmatprep.subr.mxu0 0.0
    %687 = vmatpush1.xpose.msra.mxu0 %v682
    %688 = vmatprep.subr.mxu0 0.0
    %689 = vmatpush1.xpose.msra.mxu0 0.0
    %690 = vmatprep.subr.mxu0 0.0
    %691 = vmatpush1.xpose.msra.mxu0 0.0
    %692 = vmatprep.subr.mxu0 0.0
    %693 = vmatpush1.xpose.msra.mxu0 0.0
    %694 = vmatprep.subr.mxu0 0.0
    %695 = vmatpush1.xpose.msra.mxu0 0.0
    %696 = vmatprep.subr.mxu0 0.0
    %697 = vmatpush1.xpose.msra.mxu0 0.0
    %698 = vmatprep.subr.mxu0 0.0
    %699 = vmatpush1.xpose.msra.mxu0 0.0
    %700 = vmatprep.subr.mxu0 0.0
    %701 = vmatpush1.xpose.msra.mxu0 0.0
    %702 = vmatprep.subr.mxu0 0.0
    %703 = vmatpush1.xpose.msra.mxu0 0.0
    %704 = vmatprep.subr.mxu0 0.0
    %705 = vmatpush1.xpose.msra.mxu0 0.0
    %706 = vmatprep.subr.mxu0 0.0
    %707 = vmatpush1.xpose.msra.mxu0 0.0
    %708 = vmatprep.subr.mxu0 0.0
    %709 = vmatpush1.xpose.msra.mxu0 0.0
    %710 = vmatprep.subr.mxu0 0.0
    %711 = vmatpush1.xpose.msra.mxu0 0.0
    %712 = vmatprep.subr.mxu0 0.0
    %713 = vmatpush1.xpose.msra.mxu0 0.0
    %714 = vmatprep.subr.mxu0 0.0
    %715 = vmatpush1.xpose.msra.mxu0 0.0
    %716 = vmatprep.subr.mxu0 0.0
    %717 = vmatpush1.xpose.msra.mxu0 0.0
    %718 = vmatprep.subr.mxu0 0.0
    %719 = vmatpush1.xpose.msra.mxu0 0.0
    %720 = vmatprep.subr.mxu0 0.0
    %721 = vmatpush1.xpose.msra.mxu0 0.0
    %722 = vmatprep.subr.mxu0 0.0
    %723 = vmatpush1.xpose.msra.mxu0 0.0
    %724 = vmatprep.subr.mxu0 0.0
    %725 = vmatpush1.xpose.msra.mxu0 0.0
    %726 = vmatprep.subr.mxu0 0.0
    %727 = vmatpush1.xpose.msra.mxu0 0.0
    %728 = vmatprep.subr.mxu0 0.0
    %729 = vmatpush1.xpose.msra.mxu0 0.0
    %730 = vmatprep.subr.mxu0 0.0
    %731 = vmatpush1.xpose.msra.mxu0 0.0
    %732 = vmatprep.subr.mxu0 0.0
    %733 = vmatpush1.xpose.msra.mxu0 0.0
    %734 = vmatprep.subr.mxu0 0.0
    %735 = vmatpush1.xpose.msra.mxu0 0.0
    %736 = vmatprep.subr.mxu0 0.0
    %737 = vmatpush1.xpose.msra.mxu0 0.0
    %738 = vmatprep.subr.mxu0 0.0
    %739 = vmatpush1.xpose.msra.mxu0 0.0
    %740 = vmatprep.subr.mxu0 0.0
    %741 = vmatpush1.xpose.msra.mxu0 0.0
    %742 = vmatprep.subr.mxu0 0.0
    %743 = vmatpush1.xpose.msra.mxu0 0.0
    %744 = vmatprep.subr.mxu0 0.0
    %745 = vmatpush1.xpose.msra.mxu0 0.0
    %746 = vmatprep.subr.mxu0 0.0
    %747 = vmatpush1.xpose.msra.mxu0 0.0
    %748 = vmatprep.mubr.f32.mxu0 0.0
    %749 = vmatmul.mubr.f32.gmra.mrb[0].mxu0 %v676
    %v750 = vpop.f32.mrb[0].mxu0
    %v751 = vadd.f32 %v658, %v750
    %v752 = vpop.f32.mrb[0].mxu0
    %753 = vdwg.mxu0
    %v755 = vsel %vm310, %v478, 0
    %v758 = vsel %vm310, %v300, 0
    %v761 = vsel %vm310, %v301, 0
    %763 = vmatprep.subr.mxu0 0.0
    %764 = vmatpush1.xpose.msra.mxu0 %v758
    %765 = vmatprep.subr.mxu0 0.0
    %766 = vmatpush1.xpose.msra.mxu0 %v761
    %767 = vmatprep.subr.mxu0 0.0
    %768 = vmatpush1.xpose.msra.mxu0 0.0
    %769 = vmatprep.subr.mxu0 0.0
    %770 = vmatpush1.xpose.msra.mxu0 0.0
    %771 = vmatprep.subr.mxu0 0.0
    %772 = vmatpush1.xpose.msra.mxu0 0.0
    %773 = vmatprep.subr.mxu0 0.0
    %774 = vmatpush1.xpose.msra.mxu0 0.0
    %775 = vmatprep.subr.mxu0 0.0
    %776 = vmatpush1.xpose.msra.mxu0 0.0
    %777 = vmatprep.subr.mxu0 0.0
    %778 = vmatpush1.xpose.msra.mxu0 0.0
    %779 = vmatprep.subr.mxu0 0.0
    %780 = vmatpush1.xpose.msra.mxu0 0.0
    %781 = vmatprep.subr.mxu0 0.0
    %782 = vmatpush1.xpose.msra.mxu0 0.0
    %783 = vmatprep.subr.mxu0 0.0
    %784 = vmatpush1.xpose.msra.mxu0 0.0
    %785 = vmatprep.subr.mxu0 0.0
    %786 = vmatpush1.xpose.msra.mxu0 0.0
    %787 = vmatprep.subr.mxu0 0.0
    %788 = vmatpush1.xpose.msra.mxu0 0.0
    %789 = vmatprep.subr.mxu0 0.0
    %790 = vmatpush1.xpose.msra.mxu0 0.0
    %791 = vmatprep.subr.mxu0 0.0
    %792 = vmatpush1.xpose.msra.mxu0 0.0
    %793 = vmatprep.subr.mxu0 0.0
    %794 = vmatpush1.xpose.msra.mxu0 0.0
    %795 = vmatprep.subr.mxu0 0.0
    %796 = vmatpush1.xpose.msra.mxu0 0.0
    %797 = vmatprep.subr.mxu0 0.0
    %798 = vmatpush1.xpose.msra.mxu0 0.0
    %799 = vmatprep.subr.mxu0 0.0
    %800 = vmatpush1.xpose.msra.mxu0 0.0
    %801 = vmatprep.subr.mxu0 0.0
    %802 = vmatpush1.xpose.msra.mxu0 0.0
    %803 = vmatprep.subr.mxu0 0.0
    %804 = vmatpush1.xpose.msra.mxu0 0.0
    %805 = vmatprep.subr.mxu0 0.0
    %806 = vmatpush1.xpose.msra.mxu0 0.0
    %807 = vmatprep.subr.mxu0 0.0
    %808 = vmatpush1.xpose.msra.mxu0 0.0
    %809 = vmatprep.subr.mxu0 0.0
    %810 = vmatpush1.xpose.msra.mxu0 0.0
    %811 = vmatprep.subr.mxu0 0.0
    %812 = vmatpush1.xpose.msra.mxu0 0.0
    %813 = vmatprep.subr.mxu0 0.0
    %814 = vmatpush1.xpose.msra.mxu0 0.0
    %815 = vmatprep.subr.mxu0 0.0
    %816 = vmatpush1.xpose.msra.mxu0 0.0
    %817 = vmatprep.subr.mxu0 0.0
    %818 = vmatpush1.xpose.msra.mxu0 0.0
    %819 = vmatprep.subr.mxu0 0.0
    %820 = vmatpush1.xpose.msra.mxu0 0.0
    %821 = vmatprep.subr.mxu0 0.0
    %822 = vmatpush1.xpose.msra.mxu0 0.0
    %823 = vmatprep.subr.mxu0 0.0
    %824 = vmatpush1.xpose.msra.mxu0 0.0
    %825 = vmatprep.subr.mxu0 0.0
    %826 = vmatpush1.xpose.msra.mxu0 0.0
    %827 = vmatprep.mubr.f32.mxu0 0.0
    %828 = vmatmul.mubr.f32.gmra.mrb[0].mxu0 %v755
    %v829 = vpop.f32.mrb[0].mxu0
    %v830 = vadd.f32 %v662, %v829
    %v831 = vpop.f32.mrb[0].mxu0
    %832 = vdwg.mxu0
    %v834 = vsel %vm310, %v563, 0
    %v837 = vsel %vm310, %v302, 0
    %v840 = vsel %vm310, %v303, 0
    %842 = vmatprep.subr.mxu0 0.0
    %843 = vmatpush1.xpose.msra.mxu0 %v837
    %844 = vmatprep.subr.mxu0 0.0
    %845 = vmatpush1.xpose.msra.mxu0 %v840
    %846 = vmatprep.subr.mxu0 0.0
    %847 = vmatpush1.xpose.msra.mxu0 0.0
    %848 = vmatprep.subr.mxu0 0.0
    %849 = vmatpush1.xpose.msra.mxu0 0.0
    %850 = vmatprep.subr.mxu0 0.0
    %851 = vmatpush1.xpose.msra.mxu0 0.0
    %852 = vmatprep.subr.mxu0 0.0
    %853 = vmatpush1.xpose.msra.mxu0 0.0
    %854 = vmatprep.subr.mxu0 0.0
    %855 = vmatpush1.xpose.msra.mxu0 0.0
    %856 = vmatprep.subr.mxu0 0.0
    %857 = vmatpush1.xpose.msra.mxu0 0.0
    %858 = vmatprep.subr.mxu0 0.0
    %859 = vmatpush1.xpose.msra.mxu0 0.0
    %860 = vmatprep.subr.mxu0 0.0
    %861 = vmatpush1.xpose.msra.mxu0 0.0
    %862 = vmatprep.subr.mxu0 0.0
    %863 = vmatpush1.xpose.msra.mxu0 0.0
    %864 = vmatprep.subr.mxu0 0.0
    %865 = vmatpush1.xpose.msra.mxu0 0.0
    %866 = vmatprep.subr.mxu0 0.0
    %867 = vmatpush1.xpose.msra.mxu0 0.0
    %868 = vmatprep.subr.mxu0 0.0
    %869 = vmatpush1.xpose.msra.mxu0 0.0
    %870 = vmatprep.subr.mxu0 0.0
    %871 = vmatpush1.xpose.msra.mxu0 0.0
    %872 = vmatprep.subr.mxu0 0.0
    %873 = vmatpush1.xpose.msra.mxu0 0.0
    %874 = vmatprep.subr.mxu0 0.0
    %875 = vmatpush1.xpose.msra.mxu0 0.0
    %876 = vmatprep.subr.mxu0 0.0
    %877 = vmatpush1.xpose.msra.mxu0 0.0
    %878 = vmatprep.subr.mxu0 0.0
    %879 = vmatpush1.xpose.msra.mxu0 0.0
    %880 = vmatprep.subr.mxu0 0.0
    %881 = vmatpush1.xpose.msra.mxu0 0.0
    %882 = vmatprep.subr.mxu0 0.0
    %883 = vmatpush1.xpose.msra.mxu0 0.0
    %884 = vmatprep.subr.mxu0 0.0
    %885 = vmatpush1.xpose.msra.mxu0 0.0
    %886 = vmatprep.subr.mxu0 0.0
    %887 = vmatpush1.xpose.msra.mxu0 0.0
    %888 = vmatprep.subr.mxu0 0.0
    %889 = vmatpush1.xpose.msra.mxu0 0.0
    %890 = vmatprep.subr.mxu0 0.0
    %891 = vmatpush1.xpose.msra.mxu0 0.0
    %892 = vmatprep.subr.mxu0 0.0
    %893 = vmatpush1.xpose.msra.mxu0 0.0
    %894 = vmatprep.subr.mxu0 0.0
    %895 = vmatpush1.xpose.msra.mxu0 0.0
    %896 = vmatprep.subr.mxu0 0.0
    %897 = vmatpush1.xpose.msra.mxu0 0.0
    %898 = vmatprep.subr.mxu0 0.0
    %899 = vmatpush1.xpose.msra.mxu0 0.0
    %900 = vmatprep.subr.mxu0 0.0
    %901 = vmatpush1.xpose.msra.mxu0 0.0
    %902 = vmatprep.subr.mxu0 0.0
    %903 = vmatpush1.xpose.msra.mxu0 0.0
    %904 = vmatprep.subr.mxu0 0.0
    %905 = vmatpush1.xpose.msra.mxu0 0.0
    %906 = vmatprep.mubr.f32.mxu0 0.0
    %907 = vmatmul.mubr.f32.gmra.mrb[0].mxu0 %v834
    %v908 = vpop.f32.mrb[0].mxu0
    %v909 = vadd.f32 %v666, %v908
    %v910 = vpop.f32.mrb[0].mxu0
    %911 = vdwg.mxu0
    %v913 = vsel %vm310, %v648, 0
    %v916 = vsel %vm310, %v304, 0
    %v919 = vsel %vm310, %v305, 0
    %921 = vmatprep.subr.mxu0 0.0
    %922 = vmatpush1.xpose.msra.mxu0 %v916
    %923 = vmatprep.subr.mxu0 0.0
    %924 = vmatpush1.xpose.msra.mxu0 %v919
    %925 = vmatprep.subr.mxu0 0.0
    %926 = vmatpush1.xpose.msra.mxu0 0.0
    %927 = vmatprep.subr.mxu0 0.0
    %928 = vmatpush1.xpose.msra.mxu0 0.0
    %929 = vmatprep.subr.mxu0 0.0
    %930 = vmatpush1.xpose.msra.mxu0 0.0
    %931 = vmatprep.subr.mxu0 0.0
    %932 = vmatpush1.xpose.msra.mxu0 0.0
    %933 = vmatprep.subr.mxu0 0.0
    %934 = vmatpush1.xpose.msra.mxu0 0.0
    %935 = vmatprep.subr.mxu0 0.0
    %936 = vmatpush1.xpose.msra.mxu0 0.0
    %937 = vmatprep.subr.mxu0 0.0
    %938 = vmatpush1.xpose.msra.mxu0 0.0
    %939 = vmatprep.subr.mxu0 0.0
    %940 = vmatpush1.xpose.msra.mxu0 0.0
    %941 = vmatprep.subr.mxu0 0.0
    %942 = vmatpush1.xpose.msra.mxu0 0.0
    %943 = vmatprep.subr.mxu0 0.0
    %944 = vmatpush1.xpose.msra.mxu0 0.0
    %945 = vmatprep.subr.mxu0 0.0
    %946 = vmatpush1.xpose.msra.mxu0 0.0
    %947 = vmatprep.subr.mxu0 0.0
    %948 = vmatpush1.xpose.msra.mxu0 0.0
    %949 = vmatprep.subr.mxu0 0.0
    %950 = vmatpush1.xpose.msra.mxu0 0.0
    %951 = vmatprep.subr.mxu0 0.0
    %952 = vmatpush1.xpose.msra.mxu0 0.0
    %953 = vmatprep.subr.mxu0 0.0
    %954 = vmatpush1.xpose.msra.mxu0 0.0
    %955 = vmatprep.subr.mxu0 0.0
    %956 = vmatpush1.xpose.msra.mxu0 0.0
    %957 = vmatprep.subr.mxu0 0.0
    %958 = vmatpush1.xpose.msra.mxu0 0.0
    %959 = vmatprep.subr.mxu0 0.0
    %960 = vmatpush1.xpose.msra.mxu0 0.0
    %961 = vmatprep.subr.mxu0 0.0
    %962 = vmatpush1.xpose.msra.mxu0 0.0
    %963 = vmatprep.subr.mxu0 0.0
    %964 = vmatpush1.xpose.msra.mxu0 0.0
    %965 = vmatprep.subr.mxu0 0.0
    %966 = vmatpush1.xpose.msra.mxu0 0.0
    %967 = vmatprep.subr.mxu0 0.0
    %968 = vmatpush1.xpose.msra.mxu0 0.0
    %969 = vmatprep.subr.mxu0 0.0
    %970 = vmatpush1.xpose.msra.mxu0 0.0
    %971 = vmatprep.subr.mxu0 0.0
    %972 = vmatpush1.xpose.msra.mxu0 0.0
    %973 = vmatprep.subr.mxu0 0.0
    %974 = vmatpush1.xpose.msra.mxu0 0.0
    %975 = vmatprep.subr.mxu0 0.0
    %976 = vmatpush1.xpose.msra.mxu0 0.0
    %977 = vmatprep.subr.mxu0 0.0
    %978 = vmatpush1.xpose.msra.mxu0 0.0
    %979 = vmatprep.subr.mxu0 0.0
    %980 = vmatpush1.xpose.msra.mxu0 0.0
    %981 = vmatprep.subr.mxu0 0.0
    %982 = vmatpush1.xpose.msra.mxu0 0.0
    %983 = vmatprep.subr.mxu0 0.0
    %984 = vmatpush1.xpose.msra.mxu0 0.0
    %985 = vmatprep.mubr.f32.mxu0 0.0
    %986 = vmatmul.mubr.f32.gmra.mrb[0].mxu0 %v913
    %v987 = vpop.f32.mrb[0].mxu0
    %v988 = vadd.f32 %v670, %v987
    %v989 = vpop.f32.mrb[0].mxu0
    %990 = vdwg.mxu0
    %995 = vrot.lane.b32.xlu0 %v751, 32
    %v996 = vpop.permute.xlu0 %995
    %997 = vrot.lane.b32.xlu0 %v830, 32
    %v998 = vpop.permute.xlu0 %997
    %999 = vrot.lane.b32.xlu0 %v909, 32
    %v1000 = vpop.permute.xlu0 %999
    %1001 = vrot.lane.b32.xlu0 %v988, 32
    %v1002 = vpop.permute.xlu0 %1001
    %v1007 = vsel %vm310, %v393, %v996
    %v1008 = vsel %vm310, %v478, %v998
    %v1009 = vsel %vm310, %v563, %v1000
    %v1010 = vsel %vm310, %v648, %v1002
    %v1011 = vcombine.low %v1007, %v1009
    %v1013 = vunpack.c.l.s4 1983009808
    %v1014 = vunpack.c.0.s8 %v1013
    %v1015 = vlaneseq
    %v1016 = vshrl.u32 %v1015, 7
    %v1017 = vsub.s32 %v1014, %v1016
    %v1018 = vrot.slane %v1011, %v1017
    %v1019 = vcombine.low %v1008, %v1010
    %v1021 = vunpack.c.l.s4 1983009808
    %v1022 = vunpack.c.0.s8 %v1021
    %v1023 = vlaneseq
    %v1024 = vshrl.u32 %v1023, 7
    %v1025 = vsub.s32 %v1022, %v1024
    %v1026 = vrot.slane %v1019, %v1025
    %v1027 = vcombine.low %v1018, %v1026
    %v1029 = vunpack.c.l.s4 1934713408
    %v1030 = vunpack.c.0.s8 %v1029
    %v1031 = vlaneseq
    %v1032 = vshrl.u32 %v1031, 7
    %v1033 = vsub.s32 %v1030, %v1032
    %v1034 = vrot.slane %v1027, %v1033
    %v1035 = vcombine.high %v1034, 0.0
    %vm1036 = vcmask 388096
    %1037 = vst.msk [vmem:[#allocation7] sm:$0xf] %vm1036, %v1034
    %1038 = vst.msk [vmem:[#allocation7 + $0x4] sm:$0xf] %vm1036, %v1035
    // Predicated region
    $region30: #{tpu_custom_call.1} parent=1 // pred_check
      _
    $region31: #{tpu_custom_call.1} parent=1 // pred_check_branch
      %1040 = sbr.rel (0) target = $region33
    $region32: #{tpu_custom_call.1} parent=1 // pred_region
      %s1042 = ssub.s32 128, 128
      %1043 = vsyncadd [#allocation4], %s1042
      %s1044 = sshll.u32 [#allocation7], 4
      %s1045 = int_to_ptr.vmem [resolvable:$true] %s1044
      %1050 = dma.vmem_to_hbm [thread:$0]  %s1045, 128, %s5, [#allocation4], 64, 64, 4
    $region33: #{tpu_custom_call.1} parent=1 // pred_fallthru
      _
    // Predicated region
    $region34: #{tpu_custom_call.1} parent=1 // pred_check
      _
    $region35: #{tpu_custom_call.1} parent=1 // pred_check_branch
      %1052 = sbr.rel (0) target = $region37
    $region36: #{tpu_custom_call.1} parent=1 // pred_region
      %1053 = dma.done [#allocation4], 128
    $region37: #{tpu_custom_call.1} parent=1 // pred_fallthru
      _
    %1054 = vsyncpa [#allocation3], 1
    %1055 = vsyncpa [#allocation6], 1
    %1056 = vsyncpa [#allocation4], 1

</llo_original>
